<compile_context>
chip_gen: v7x
topology: tpu7x:2x2x1
jax: 0.10.0
libtpu: 0.0.40
codegen_flags: <defaults>
</compile_context>

<pallas_src>
from functools import partial

import jax
import jax.numpy as jnp
from jax.experimental import pallas as pl
from jax.experimental.pallas import tpu as pltpu


# ---------------------------------------------------------------------------
# Kernels
# ---------------------------------------------------------------------------

def _gated_conv3(xp, xc, xn, x_f32, wc_ref, wg_ref, bc_ref, bg_ref):
    """Shared math: 3-tap conv + 3-tap gate conv as 6 accumulated MXU matmuls
    (f32 accumulation), sigmoid on the EUP, and the gated blend
    out = gate*conv + (1-gate)*x rewritten as x + gate*(conv - x)."""
    def conv3(w_ref, b_ref):
        y = jnp.dot(xp, w_ref[0], preferred_element_type=jnp.float32)
        y += jnp.dot(xc, w_ref[1], preferred_element_type=jnp.float32)
        y += jnp.dot(xn, w_ref[2], preferred_element_type=jnp.float32)
        return y + b_ref[...]

    conv_out = conv3(wc_ref, bc_ref)
    gate = jax.nn.sigmoid(conv3(wg_ref, bg_ref))          # EUP
    return x_f32 + gate * (conv_out - x_f32)


def dgcnn_kernel(x_ref, m_ref, wc_ref, wg_ref, bc_ref, bg_ref, o_ref, *, L, mxu_dtype):
    """Main path: x flattened to (B*L, C); each grid step owns whole batches."""
    x = x_ref[...].astype(jnp.float32) * m_ref[...].astype(jnp.float32)   # (M, C)
    M = x.shape[0]

    # Row index within its batch ((M,1) iota only; tile starts on a batch boundary).
    rows = jax.lax.broadcasted_iota(jnp.int32, (M, 1), 0) % L

    # Shifted neighbours via XLU roll; zero rows whose neighbour would come from
    # another batch (or wrap around the tile).
    x_prev = jnp.where(rows == 0, 0.0, pltpu.roll(x, 1, 0))            # x[l-1]
    x_next = jnp.where(rows == L - 1, 0.0, pltpu.roll(x, M - 1, 0))    # x[l+1]

    md = jnp.float32 if mxu_dtype is None else mxu_dtype
    out = _gated_conv3(x_prev.astype(md), x.astype(md), x_next.astype(md), x,
                       wc_ref, wg_ref, bc_ref, bg_ref)
    o_ref[...] = out.astype(o_ref.dtype)


def dgcnn_ltile_kernel(x_ref, xp_ref, xn_ref, wc_ref, wg_ref, bc_ref, bg_ref,
                       o_ref, *, mxu_dtype):
    """Fallback path: L tiled; the +/-1 halo comes from pre-shifted inputs."""
    md = jnp.float32 if mxu_dtype is None else mxu_dtype
    x_f32 = x_ref[0].astype(jnp.float32)
    out = _gated_conv3(xp_ref[0].astype(md), x_ref[0].astype(md),
                       xn_ref[0].astype(md), x_f32,
                       wc_ref, wg_ref, bc_ref, bg_ref)
    o_ref[0] = out.astype(o_ref.dtype)


# ---------------------------------------------------------------------------
# VMEM accounting / tile selection
# ---------------------------------------------------------------------------

_ROWS_HI = 2048          # preferred upper bound on rows per grid step
_TEMP_TILES = 9          # in-kernel f32 temporaries, in units of one f32 x-tile


def _padded_tile_bytes(rows, cols, itemsize):
    """VMEM bytes of a (rows, cols) array: (8*packing, 128) native 4 KiB tiles."""
    packing = max(1, 4 // itemsize)
    return pl.cdiv(rows, 8 * packing) * pl.cdiv(cols, 128) * 4096


def _weights_bytes(C, w_isz, bufs):
    # two (3, C, C) tap stacks + two (1, C) f32 biases
    return bufs * (2 * 3 * _padded_tile_bytes(C, C, w_isz)
                   + 2 * _padded_tile_bytes(1, C, 4))


def _vmem_estimate(rows, C, x_isz, out_isz, mask_isz, w_isz):
    est = 2 * _padded_tile_bytes(rows, C, x_isz)          # x tile, double-buffered
    est += 2 * _padded_tile_bytes(rows, C, out_isz)       # out tile, double-buffered
    est += 2 * _padded_tile_bytes(rows, 1, mask_isz)      # mask tile (lane-padded)
    est += _weights_bytes(C, w_isz, bufs=1)               # single-buffered constants
    est += _TEMP_TILES * _padded_tile_bytes(rows, C, 4)   # in-kernel f32 temporaries
    return est


def _vmem_estimate_l(rows, C, x_isz, out_isz, w_isz):
    est = 3 * 2 * _padded_tile_bytes(rows, C, x_isz)      # x, x_prev, x_next tiles
    est += 2 * _padded_tile_bytes(rows, C, out_isz)
    est += _weights_bytes(C, w_isz, bufs=1)
    est += _TEMP_TILES * _padded_tile_bytes(rows, C, 4)
    return est


def _vmem_capacity_bytes():
    try:
        cap = getattr(pltpu.get_tpu_info(), "vmem_capacity_bytes", None)
        if cap:
            return int(cap)
    except Exception:
        pass
    return 64 << 20      # conservative default: v7x per-TensorCore VMEM


def _pick_tile_b(B, L, C, *, x_isz, out_isz, mask_isz, w_isz, budget):
    """Largest batch-count per tile whose VMEM estimate fits `budget`,
    preferring <= 2048 rows and keeping >= 2 grid steps when B >= 2.
    Returns None when even a single batch does not fit (L-tiling fallback)."""
    max_tb = B if B == 1 else max(1, B // 2)     # keep both v7x TCs busy
    fits = []
    for tb in range(1, max_tb + 1):
        if B % tb:
            continue
        rows = tb * L
        if tb != B and rows % 8:                 # (8,128) sublane rule, partial blocks
            continue
        if _vmem_estimate(rows, C, x_isz, out_isz, mask_isz, w_isz) > budget:
            continue
        fits.append(tb)
    if not fits:
        # Last resort: a single full-array block is exempt from the %8 rule.
        if _vmem_estimate(B * L, C, x_isz, out_isz, mask_isz, w_isz) <= budget:
            return B
        return None
    capped = [tb for tb in fits if tb * L <= _ROWS_HI]
    return max(capped) if capped else min(fits)


def _pick_tile_l(L, C, *, x_isz, out_isz, w_isz, budget):
    cands = [tl for tl in range(8, L, 8) if L % tl == 0] + [L]
    fits = [tl for tl in cands
            if _vmem_estimate_l(tl, C, x_isz, out_isz, w_isz) <= budget]
    if not fits:
        # TODO(synk): channel (C) tiling for pathologically wide channels.
        raise NotImplementedError("DGCNN: even an 8-row L tile exceeds the VMEM budget")
    capped = [tl for tl in fits if tl <= _ROWS_HI]
    return max(capped) if capped else min(fits)


# ---------------------------------------------------------------------------
# Wrapper
# ---------------------------------------------------------------------------

def dgcnn_forward(x, mask, w_conv, b_conv, w_gate, b_gate, *,
                  mxu_dtype=jnp.bfloat16, mask_dtype=jnp.bfloat16,
                  vmem_ceiling_bytes=None, force_l_tiling=False):
    """x: (B, L, C) float, mask broadcastable to (B, L, 1),
    w_*: (C_out, C_in, 3) PyTorch conv1d weights, b_*: (C,).
    Returns (B, L, C) in x.dtype (pass bf16 x for ~2x HBM I/O savings).
    mxu_dtype: MXU operand dtype (bf16 default, f32 accumulation; None = strict f32)."""
    B, L, C = x.shape
    out_dtype = x.dtype

    # Tap-stacked weights (3, C_in, C_out); MXU operand dtype applied here
    # (halves weight HBM/VMEM for bf16).  Biases / accumulation stay f32.
    w_dtype = jnp.float32 if mxu_dtype is None else mxu_dtype
    wc = jnp.transpose(w_conv, (2, 1, 0)).astype(w_dtype)
    wg = jnp.transpose(w_gate, (2, 1, 0)).astype(w_dtype)
    bc = b_conv.reshape(1, C).astype(jnp.float32)
    bg = b_gate.reshape(1, C).astype(jnp.float32)

    if vmem_ceiling_bytes is None:
        # ~3/4 of this generation's physical VMEM (v5e/v6e 128 MiB, v7x 64 MiB).
        vmem_ceiling_bytes = (_vmem_capacity_bytes() * 3) // 4

    x_isz = jnp.dtype(x.dtype).itemsize
    o_isz = jnp.dtype(out_dtype).itemsize
    m_isz = jnp.dtype(mask_dtype).itemsize
    w_isz = jnp.dtype(w_dtype).itemsize

    tile_b = None if force_l_tiling else _pick_tile_b(
        B, L, C, x_isz=x_isz, out_isz=o_isz, mask_isz=m_isz, w_isz=w_isz,
        budget=vmem_ceiling_bytes)

    if tile_b is not None:
        # ---- Main path: batch-aligned row tiles on flattened (B*L, C) ------
        m_tile = tile_b * L
        grid = (B // tile_b,)
        est = _vmem_estimate(m_tile, C, x_isz, o_isz, m_isz, w_isz)
        vmem_limit = int(min(vmem_ceiling_bytes, max(est * 5 // 4, 32 << 20)))

        xf = x.reshape(B * L, C)
        mf = jnp.broadcast_to(mask, (B, L, 1)).reshape(B * L, 1).astype(mask_dtype)

        out = pl.pallas_call(
            partial(dgcnn_kernel, L=L, mxu_dtype=mxu_dtype),
            out_shape=jax.ShapeDtypeStruct((B * L, C), out_dtype),
            grid=grid,
            in_specs=[
                pl.BlockSpec((m_tile, C), lambda i: (i, 0)),           # x
                pl.BlockSpec((m_tile, 1), lambda i: (i, 0)),           # mask (bf16)
                pl.BlockSpec((3, C, C), lambda i: (0, 0, 0),
                             pipeline_mode=pl.Buffered(1)),            # conv weights
                pl.BlockSpec((3, C, C), lambda i: (0, 0, 0),
                             pipeline_mode=pl.Buffered(1)),            # gate weights
                pl.BlockSpec((1, C), lambda i: (0, 0),
                             pipeline_mode=pl.Buffered(1)),            # conv bias
                pl.BlockSpec((1, C), lambda i: (0, 0),
                             pipeline_mode=pl.Buffered(1)),            # gate bias
            ],
            out_specs=pl.BlockSpec((m_tile, C), lambda i: (i, 0)),
            compiler_params=pltpu.CompilerParams(
                dimension_semantics=("parallel",),
                vmem_limit_bytes=vmem_limit),
        )(xf, mf, wc, wg, bc, bg)
        return out.reshape(B, L, C)

    # ---- Fallback: tile along L with pre-shifted neighbour arrays ----------
    tile_l = _pick_tile_l(L, C, x_isz=x_isz, out_isz=o_isz, w_isz=w_isz,
                          budget=vmem_ceiling_bytes)
    est = _vmem_estimate_l(tile_l, C, x_isz, o_isz, w_isz)
    vmem_limit = int(min(vmem_ceiling_bytes, max(est * 5 // 4, 32 << 20)))

    m = jnp.broadcast_to(mask, (B, L, 1)).astype(jnp.float32)
    xm = (x.astype(jnp.float32) * m).astype(x.dtype)
    xp = jnp.pad(xm, ((0, 0), (1, 0), (0, 0)))[:, :L, :]   # xm[b, l-1] (0 at l=0)
    xn = jnp.pad(xm, ((0, 0), (0, 1), (0, 0)))[:, 1:, :]   # xm[b, l+1] (0 at l=L-1)

    blk = lambda b, l: (b, l, 0)
    out = pl.pallas_call(
        partial(dgcnn_ltile_kernel, mxu_dtype=mxu_dtype),
        out_shape=jax.ShapeDtypeStruct((B, L, C), out_dtype),
        grid=(B, L // tile_l),
        in_specs=[
            pl.BlockSpec((1, tile_l, C), blk),
            pl.BlockSpec((1, tile_l, C), blk),
            pl.BlockSpec((1, tile_l, C), blk),
            pl.BlockSpec((3, C, C), lambda b, l: (0, 0, 0),
                         pipeline_mode=pl.Buffered(1)),
            pl.BlockSpec((3, C, C), lambda b, l: (0, 0, 0),
                         pipeline_mode=pl.Buffered(1)),
            pl.BlockSpec((1, C), lambda b, l: (0, 0),
                         pipeline_mode=pl.Buffered(1)),
            pl.BlockSpec((1, C), lambda b, l: (0, 0),
                         pipeline_mode=pl.Buffered(1)),
        ],
        out_specs=pl.BlockSpec((1, tile_l, C), blk),
        compiler_params=pltpu.CompilerParams(
            dimension_semantics=("parallel", "parallel"),
            vmem_limit_bytes=vmem_limit),
    )(xm, xp, xn, wc, wg, bc, bg)
    return out


# ---------------------------------------------------------------------------
# Pure-JAX reference + init (mirrors the PyTorch module)
# ---------------------------------------------------------------------------

def ref_forward(x, mask, w_conv, b_conv, w_gate, b_gate):
    xm = x * mask
    xt = jnp.transpose(xm, (0, 2, 1))            # (B, C, L)

    def conv1d(x_ncl, w, b):
        y = jax.lax.conv_general_dilated(
            x_ncl, w, window_strides=(1,), padding=((1, 1),),
            dimension_numbers=("NCH", "OIH", "NCH"))
        return y + b[None, :, None]

    gate = jax.nn.sigmoid(conv1d(xt, w_gate, b_gate))
    out = gate * conv1d(xt, w_conv, b_conv) + (1.0 - gate) * xt
    return jnp.transpose(out, (0, 2, 1))


def init_params(key, channels, ksize=3):
    """Deterministic init matching nn.init.xavier_uniform_ / uniform_."""
    k_wc, k_bc, k_wg, k_bg = jax.random.split(key, 4)
    fan = channels * ksize
    bound = (6.0 / (fan + fan)) ** 0.5
    w_conv = jax.random.uniform(k_wc, (channels, channels, ksize),
                                jnp.float32, -bound, bound)
    w_gate = jax.random.uniform(k_wg, (channels, channels, ksize),
                                jnp.float32, -bound, bound)
    b_conv = jax.random.uniform(k_bc, (channels,), jnp.float32, 0.0, 1.0)
    b_gate = jax.random.uniform(k_bg, (channels,), jnp.float32, 0.0, 1.0)
    return w_conv, b_conv, w_gate, b_gate


if __name__ == "__main__":
    B, L, C = 2, 16, 32
    key = jax.random.PRNGKey(0)
    k_x, k_m, k_p = jax.random.split(key, 3)

    x = jax.random.normal(k_x, (B, L, C), jnp.float32)
    mask = (jax.random.uniform(k_m, (B, L, 1)) > 0.2).astype(jnp.float32)
    w_conv, b_conv, w_gate, b_gate = init_params(k_p, C)

    ref = ref_forward(x, mask, w_conv, b_conv, w_gate, b_gate)

    # 1) strict f32 MXU path (main batch-tiled kernel; tile_b capped at B//2 ->
    #    grid has 2 steps, one per v7x TensorCore).
    out_f32 = jax.block_until_ready(
        dgcnn_forward(x, mask, w_conv, b_conv, w_gate, b_gate, mxu_dtype=None))
    assert out_f32.shape == (B, L, C)
    assert jnp.allclose(out_f32, ref, atol=1e-5, rtol=1e-5), "f32 path mismatch"

    # 2) default bf16 MXU operands (f32 accumulation) — relaxed tolerance.
    out_bf = jax.block_until_ready(
        dgcnn_forward(x, mask, w_conv, b_conv, w_gate, b_gate))
    assert jnp.allclose(out_bf, ref, atol=1e-1, rtol=1e-1), "bf16-MXU path mismatch"

    # 3) forced L-tiling fallback path (strict f32) to keep it compile-tested.
    out_lt = jax.block_until_ready(
        dgcnn_forward(x, mask, w_conv, b_conv, w_gate, b_gate,
                      mxu_dtype=None, force_l_tiling=True))
    assert jnp.allclose(out_lt, ref, atol=1e-5, rtol=1e-5), "L-tiled path mismatch"

    print("KERNEL_OK")
</pallas_src>

<mosaic_0001>
module attributes {stable_mosaic.version = 11 : i64} {
  func.func @dgcnn_kernel(%arg0: i32, %arg1: memref<16x32xf32, #tpu.memory_space<vmem>>, %arg2: memref<16x1xbf16, #tpu.memory_space<vmem>>, %arg3: memref<3x32x32xf32, #tpu.memory_space<vmem>>, %arg4: memref<3x32x32xf32, #tpu.memory_space<vmem>>, %arg5: memref<1x32xf32, #tpu.memory_space<vmem>>, %arg6: memref<1x32xf32, #tpu.memory_space<vmem>>, %arg7: memref<16x32xf32, #tpu.memory_space<vmem>>) attributes {dimension_semantics = [#tpu.dimension_semantics<parallel>], iteration_bounds = array<i64: 2>, scalar_prefetch = 0 : i64, scratch_operands = 0 : i64, tpu.core_type = #tpu.core_type<tc>, window_params = [{transform_indices = @transform_0, window_bounds = array<i64: 16, 32>}, {transform_indices = @transform_1, window_bounds = array<i64: 16, 1>}, {pipeline_mode = #tpu.pipeline_mode<synchronous>, transform_indices = @transform_2, window_bounds = array<i64: 3, 32, 32>}, {pipeline_mode = #tpu.pipeline_mode<synchronous>, transform_indices = @transform_3, window_bounds = array<i64: 3, 32, 32>}, {pipeline_mode = #tpu.pipeline_mode<synchronous>, transform_indices = @transform_4, window_bounds = array<i64: 1, 32>}, {pipeline_mode = #tpu.pipeline_mode<synchronous>, transform_indices = @transform_5, window_bounds = array<i64: 1, 32>}, {transform_indices = @transform_6, window_bounds = array<i64: 16, 32>}]} {
    %c0 = arith.constant 0 : index
    %c0_0 = arith.constant 0 : index
    %0 = vector.load %arg1[%c0, %c0_0] : memref<16x32xf32, #tpu.memory_space<vmem>>, vector<16x32xf32>
    %c0_1 = arith.constant 0 : index
    %c0_2 = arith.constant 0 : index
    %1 = vector.load %arg2[%c0_1, %c0_2] : memref<16x1xbf16, #tpu.memory_space<vmem>>, vector<16x1xbf16>
    %2 = arith.extf %1 : vector<16x1xbf16> to vector<16x1xf32>
    %3 = vector.broadcast %2 : vector<16x1xf32> to vector<16x32xf32>
    %4 = arith.mulf %0, %3 : vector<16x32xf32>
    %5 = tpu.iota {dimensions = array<i32: 0>} : vector<16x1xi32>
    %c16_i32 = arith.constant 16 : i32
    %c0_i32 = arith.constant 0 : i32
    %6 = arith.cmpi eq, %c16_i32, %c0_i32 : i32
    %c1_i32 = arith.constant 1 : i32
    %7 = arith.select %6, %c1_i32, %c16_i32 : i32
    %8 = vector.broadcast %7 : i32 to vector<16x1xi32>
    %9 = arith.remsi %5, %8 : vector<16x1xi32>
    %c0_i32_3 = arith.constant 0 : i32
    %10 = vector.broadcast %c0_i32_3 : i32 to vector<16x1xi32>
    %11 = arith.cmpi ne, %9, %10 : vector<16x1xi32>
    %c0_i32_4 = arith.constant 0 : i32
    %12 = vector.broadcast %c0_i32_4 : i32 to vector<16x1xi32>
    %13 = arith.cmpi slt, %9, %12 : vector<16x1xi32>
    %c0_i32_5 = arith.constant 0 : i32
    %14 = arith.cmpi slt, %7, %c0_i32_5 : i32
    %15 = vector.broadcast %14 : i1 to vector<16x1xi1>
    %16 = vector.broadcast %15 : vector<16x1xi1> to vector<16x1xi1>
    %17 = arith.xori %13, %16 : vector<16x1xi1>
    %18 = arith.andi %17, %11 : vector<16x1xi1>
    %19 = vector.broadcast %7 : i32 to vector<16x1xi32>
    %20 = arith.addi %9, %19 : vector<16x1xi32>
    %21 = arith.select %18, %20, %9 : vector<16x1xi1>, vector<16x1xi32>
    %c0_i32_6 = arith.constant 0 : i32
    %22 = vector.broadcast %c0_i32_6 : i32 to vector<16x1xi32>
    %23 = arith.cmpi eq, %21, %22 : vector<16x1xi32>
    %c1_i32_7 = arith.constant 1 : i32
    %24 = tpu.dynamic_rotate %4 by %c1_i32_7 dim 0 : vector<16x32xf32>, i32 -> vector<16x32xf32>
    %cst = arith.constant 0.000000e+00 : f32
    %25 = vector.shape_cast %23 : vector<16x1xi1> to vector<16x1xi1>
    %26 = vector.broadcast %25 : vector<16x1xi1> to vector<16x32xi1>
    %27 = vector.broadcast %cst : f32 to vector<16x32xf32>
    %28 = arith.select %26, %27, %24 : vector<16x32xi1>, vector<16x32xf32>
    %c15_i32 = arith.constant 15 : i32
    %29 = vector.broadcast %c15_i32 : i32 to vector<16x1xi32>
    %30 = arith.cmpi eq, %21, %29 : vector<16x1xi32>
    %c15_i32_8 = arith.constant 15 : i32
    %31 = tpu.dynamic_rotate %4 by %c15_i32_8 dim 0 : vector<16x32xf32>, i32 -> vector<16x32xf32>
    %cst_9 = arith.constant 0.000000e+00 : f32
    %32 = vector.shape_cast %30 : vector<16x1xi1> to vector<16x1xi1>
    %33 = vector.broadcast %32 : vector<16x1xi1> to vector<16x32xi1>
    %34 = vector.broadcast %cst_9 : f32 to vector<16x32xf32>
    %35 = arith.select %33, %34, %31 : vector<16x32xi1>, vector<16x32xf32>
    %c0_10 = arith.constant 0 : index
    %c0_11 = arith.constant 0 : index
    %c0_12 = arith.constant 0 : index
    %36 = vector.load %arg3[%c0_10, %c0_11, %c0_12] : memref<3x32x32xf32, #tpu.memory_space<vmem>>, vector<1x32x32xf32>
    %37 = vector.shape_cast %36 : vector<1x32x32xf32> to vector<32x32xf32>
    %cst_13 = arith.constant dense<0.000000e+00> : vector<16x32xf32>
    %38 = tpu.matmul %28, %37, %cst_13 {dimension_numbers = #tpu.dot_dimension_numbers<[1], [0], [0], [1], [0, 0, 1, 1], [], []>} : vector<16x32xf32>, vector<32x32xf32>, vector<16x32xf32> -> vector<16x32xf32>
    %c1 = arith.constant 1 : index
    %c0_14 = arith.constant 0 : index
    %c0_15 = arith.constant 0 : index
    %39 = vector.load %arg3[%c1, %c0_14, %c0_15] : memref<3x32x32xf32, #tpu.memory_space<vmem>>, vector<1x32x32xf32>
    %40 = vector.shape_cast %39 : vector<1x32x32xf32> to vector<32x32xf32>
    %cst_16 = arith.constant dense<0.000000e+00> : vector<16x32xf32>
    %41 = tpu.matmul %4, %40, %cst_16 {dimension_numbers = #tpu.dot_dimension_numbers<[1], [0], [0], [1], [0, 0, 1, 1], [], []>} : vector<16x32xf32>, vector<32x32xf32>, vector<16x32xf32> -> vector<16x32xf32>
    %42 = arith.addf %38, %41 : vector<16x32xf32>
    %c2 = arith.constant 2 : index
    %c0_17 = arith.constant 0 : index
    %c0_18 = arith.constant 0 : index
    %43 = vector.load %arg3[%c2, %c0_17, %c0_18] : memref<3x32x32xf32, #tpu.memory_space<vmem>>, vector<1x32x32xf32>
    %44 = vector.shape_cast %43 : vector<1x32x32xf32> to vector<32x32xf32>
    %cst_19 = arith.constant dense<0.000000e+00> : vector<16x32xf32>
    %45 = tpu.matmul %35, %44, %cst_19 {dimension_numbers = #tpu.dot_dimension_numbers<[1], [0], [0], [1], [0, 0, 1, 1], [], []>} : vector<16x32xf32>, vector<32x32xf32>, vector<16x32xf32> -> vector<16x32xf32>
    %46 = arith.addf %42, %45 : vector<16x32xf32>
    %c0_20 = arith.constant 0 : index
    %c0_21 = arith.constant 0 : index
    %47 = vector.load %arg5[%c0_20, %c0_21] : memref<1x32xf32, #tpu.memory_space<vmem>>, vector<1x32xf32>
    %48 = vector.broadcast %47 : vector<1x32xf32> to vector<16x32xf32>
    %49 = arith.addf %46, %48 : vector<16x32xf32>
    %c0_22 = arith.constant 0 : index
    %c0_23 = arith.constant 0 : index
    %c0_24 = arith.constant 0 : index
    %50 = vector.load %arg4[%c0_22, %c0_23, %c0_24] : memref<3x32x32xf32, #tpu.memory_space<vmem>>, vector<1x32x32xf32>
    %51 = vector.shape_cast %50 : vector<1x32x32xf32> to vector<32x32xf32>
    %cst_25 = arith.constant dense<0.000000e+00> : vector<16x32xf32>
    %52 = tpu.matmul %28, %51, %cst_25 {dimension_numbers = #tpu.dot_dimension_numbers<[1], [0], [0], [1], [0, 0, 1, 1], [], []>} : vector<16x32xf32>, vector<32x32xf32>, vector<16x32xf32> -> vector<16x32xf32>
    %c1_26 = arith.constant 1 : index
    %c0_27 = arith.constant 0 : index
    %c0_28 = arith.constant 0 : index
    %53 = vector.load %arg4[%c1_26, %c0_27, %c0_28] : memref<3x32x32xf32, #tpu.memory_space<vmem>>, vector<1x32x32xf32>
    %54 = vector.shape_cast %53 : vector<1x32x32xf32> to vector<32x32xf32>
    %cst_29 = arith.constant dense<0.000000e+00> : vector<16x32xf32>
    %55 = tpu.matmul %4, %54, %cst_29 {dimension_numbers = #tpu.dot_dimension_numbers<[1], [0], [0], [1], [0, 0, 1, 1], [], []>} : vector<16x32xf32>, vector<32x32xf32>, vector<16x32xf32> -> vector<16x32xf32>
    %56 = arith.addf %52, %55 : vector<16x32xf32>
    %c2_30 = arith.constant 2 : index
    %c0_31 = arith.constant 0 : index
    %c0_32 = arith.constant 0 : index
    %57 = vector.load %arg4[%c2_30, %c0_31, %c0_32] : memref<3x32x32xf32, #tpu.memory_space<vmem>>, vector<1x32x32xf32>
    %58 = vector.shape_cast %57 : vector<1x32x32xf32> to vector<32x32xf32>
    %cst_33 = arith.constant dense<0.000000e+00> : vector<16x32xf32>
    %59 = tpu.matmul %35, %58, %cst_33 {dimension_numbers = #tpu.dot_dimension_numbers<[1], [0], [0], [1], [0, 0, 1, 1], [], []>} : vector<16x32xf32>, vector<32x32xf32>, vector<16x32xf32> -> vector<16x32xf32>
    %60 = arith.addf %56, %59 : vector<16x32xf32>
    %c0_34 = arith.constant 0 : index
    %c0_35 = arith.constant 0 : index
    %61 = vector.load %arg6[%c0_34, %c0_35] : memref<1x32xf32, #tpu.memory_space<vmem>>, vector<1x32xf32>
    %62 = vector.broadcast %61 : vector<1x32xf32> to vector<16x32xf32>
    %63 = arith.addf %60, %62 : vector<16x32xf32>
    %64 = arith.negf %63 : vector<16x32xf32>
    %65 = math.exp %64 : vector<16x32xf32>
    %cst_36 = arith.constant 1.000000e+00 : f32
    %66 = vector.broadcast %cst_36 : f32 to vector<16x32xf32>
    %67 = arith.addf %66, %65 : vector<16x32xf32>
    %68 = arith.divf %66, %67 : vector<16x32xf32>
    %69 = arith.subf %49, %4 : vector<16x32xf32>
    %70 = arith.mulf %68, %69 : vector<16x32xf32>
    %71 = arith.addf %4, %70 : vector<16x32xf32>
    %c0_37 = arith.constant 0 : index
    %c0_38 = arith.constant 0 : index
    %72 = vector.load %arg7[%c0_37, %c0_38] : memref<16x32xf32, #tpu.memory_space<vmem>>, vector<16x32xf32>
    tpu.vector_store %arg7[%c0_37, %c0_38], %71 {strides = array<i32>} : memref<16x32xf32, #tpu.memory_space<vmem>>, vector<16x32xf32>,
    return
  }
  func.func @transform_0(%arg0: i32) -> (i32, i32) {
    %c0_i32 = arith.constant 0 : i32
    %c0_i32_0 = arith.constant 0 : i32
    return %arg0, %c0_i32 : i32, i32
  }
  func.func @transform_1(%arg0: i32) -> (i32, i32) {
    %c0_i32 = arith.constant 0 : i32
    %c0_i32_0 = arith.constant 0 : i32
    return %arg0, %c0_i32 : i32, i32
  }
  func.func @transform_2(%arg0: i32) -> (i32, i32, i32) {
    %c0_i32 = arith.constant 0 : i32
    %c0_i32_0 = arith.constant 0 : i32
    %c0_i32_1 = arith.constant 0 : i32
    %c0_i32_2 = arith.constant 0 : i32
    return %c0_i32, %c0_i32_0, %c0_i32_1 : i32, i32, i32
  }
  func.func @transform_3(%arg0: i32) -> (i32, i32, i32) {
    %c0_i32 = arith.constant 0 : i32
    %c0_i32_0 = arith.constant 0 : i32
    %c0_i32_1 = arith.constant 0 : i32
    %c0_i32_2 = arith.constant 0 : i32
    return %c0_i32, %c0_i32_0, %c0_i32_1 : i32, i32, i32
  }
  func.func @transform_4(%arg0: i32) -> (i32, i32) {
    %c0_i32 = arith.constant 0 : i32
    %c0_i32_0 = arith.constant 0 : i32
    %c0_i32_1 = arith.constant 0 : i32
    return %c0_i32, %c0_i32_0 : i32, i32
  }
  func.func @transform_5(%arg0: i32) -> (i32, i32) {
    %c0_i32 = arith.constant 0 : i32
    %c0_i32_0 = arith.constant 0 : i32
    %c0_i32_1 = arith.constant 0 : i32
    return %c0_i32, %c0_i32_0 : i32, i32
  }
  func.func @transform_6(%arg0: i32) -> (i32, i32) {
    %c0_i32 = arith.constant 0 : i32
    %c0_i32_0 = arith.constant 0 : i32
    return %arg0, %c0_i32 : i32, i32
  }
}

</mosaic_0001>

<llo_original>
// kernel: tpu_custom_call.1
$region0: #{tpu_custom_call.1}
  #allocation0 [shape = 'u32[]', space=smem, size = 0x4, offset = 0x4, fixed_abs, tag = 'smem constant byte address 0x4 - core index']
  #allocation1 [shape = 'u32[144,128]{1,0:T(1,128)}', space=vmem, size = 0x12000, scoped, tag = 'internal scratch']
  %s0 = inlined_call_operand.hbm [shape: f32[32,32], index: 0, kind: input, shape index: {}]
  %s1 = inlined_call_operand.vmem [shape: bf16[32,1], index: 1, kind: input, shape index: {}]
  %s2 = inlined_call_operand.hbm [shape: f32[3,32,32], index: 2, kind: input, shape index: {}]
  %s3 = inlined_call_operand.hbm [shape: f32[3,32,32], index: 3, kind: input, shape index: {}]
  %s4 = inlined_call_operand.vmem [shape: f32[1,32], index: 4, kind: input, shape index: {}]
  %s5 = inlined_call_operand.vmem [shape: f32[1,32], index: 5, kind: input, shape index: {}]
  %s6 = inlined_call_operand.hbm [shape: f32[32,32], index: 6, kind: output, shape index: {}]
  %s7 = sld [smem:[#allocation0]]
  $region69: #{tpu_custom_call.1} parent=0
    _
  %s9 = ssub.s32 1, %s7
  %s10 = scalar_select 0, %s9, %s7
  $region1: #{tpu_custom_call.1} parent=0
    #allocation2 [shape = 'u8[16384]{0}', space=vmem, size = 0x4000, scoped, tag = 'input window, operand 0']
    #allocation3 [shape = 's32[2]{0}', space=sflag, size = 0x8, scoped, tag = 'scoped memory for tpu_custom_call.1']
    #allocation4 [shape = 's32[2]{0}', space=sflag, size = 0x8, scoped, tag = 'scoped memory for tpu_custom_call.1']
    #allocation5 [shape = 'u8[49152]{0}', space=vmem, size = 0xc000, scoped, tag = 'input window, operand 2, single buffered']
    #allocation6 [shape = 's32[1]{0}', space=sflag, size = 0x4, scoped, tag = 'scoped memory for tpu_custom_call.1']
    #allocation7 [shape = 'u8[49152]{0}', space=vmem, size = 0xc000, scoped, tag = 'input window, operand 3, single buffered']
    #allocation8 [shape = 'u8[16384]{0}', space=vmem, size = 0x4000, scoped, tag = 'output window, operand 0']
    %11 = vsyncpa [#allocation3], 0
    %s12 = scalar_lea.sflag [#allocation3], 1
    %13 = vsyncpa %s12, 0
    %14 = vsyncpa [#allocation6], 0
    %15 = vsyncpa [#allocation4], 0
    %s16 = scalar_lea.sflag [#allocation4], 1
    %17 = vsyncpa %s16, 0
    loop: start=0, step=1, limit=4
    $region2: #{tpu_custom_call.1} parent=1 // loop_pre_header
      _
    $region3: #{tpu_custom_call.1} parent=1 // loop_header
      %s19 = sphi 0, %s23
      %p20 = scmp.ge.s32.totalorder %s19, 4
      %s29 = sphi 0, %s31
      %s32 = sphi 0, %s29
      %s33 = sphi 0, %s32
      %s49 = sphi 0, %s33
      %s55 = sphi 0, %s57
      %s58 = sphi 0, %s55
      %s59 = sphi 0, %s58
      %s75 = sphi 0, %s59
      %s79 = sphi 0, %s79
      %s81 = sphi 0, %s79
      %s82 = sphi 0, %s81
      %s96 = sphi 0, %s82
      %s100 = sphi 0, %s100
      %s102 = sphi 0, %s100
      %s103 = sphi 0, %s102
      %s117 = sphi 0, %s103
      %s121 = sphi 0, %s121
      %s123 = sphi 0, %s121
      %s124 = sphi 0, %s123
      %s138 = sphi 0, %s124
      %s142 = sphi 0, %s142
      %s144 = sphi 0, %s142
      %s145 = sphi 0, %s144
      %s159 = sphi 0, %s145
      %s165 = sphi 0, %s167
      %s168 = sphi 0, %s165
      %s169 = sphi 0, %s168
      %s185 = sphi 0, %s169
    $region4: #{tpu_custom_call.1} parent=1 // loop_header_branch
      %22 = sbr.rel (%p20) target = $region8
    $region5: #{tpu_custom_call.1} parent=1 // loop_body
      %s24 = ssub.s32 %s19, 1
      %s25 = ssub.s32 %s19, 2
      %s26 = sadd.s32 %s19, 1
      %s27 = ssub.s32 %s19, %s26
      %p28 = scmp.eq.s32.totalorder %s27, 0
      %s30 = sadd.s32 %s29, 1
      %s31 = scalar_select %p28, %s29, %s30
      %p34 = pneg %p28
      %p35 = scmp.eq.s32.totalorder %s19, 1
      %p36 = por %p34, %p35
      %p37 = scmp.ne.s32.totalorder %s29, %s32
      %p38 = scmp.eq.s32.totalorder %s19, 0
      %p39 = por %p37, %p38
      %p40 = scmp.ne.s32.totalorder %s29, %s32
      %p41 = scmp.eq.s32.totalorder %s24, 1
      %p42 = por %p40, %p41
      %p43 = scmp.ne.s32.totalorder %s32, %s33
      %p44 = scmp.eq.s32.totalorder %s24, 0
      %p45 = por %p43, %p44
      %p46 = scmp.ne.s32.totalorder %s32, %s33
      %p47 = scmp.eq.s32.totalorder %s25, 1
      %p48 = por %p46, %p47
      %p50 = scmp.ne.s32.totalorder %s33, %s49
      %p51 = scmp.eq.s32.totalorder %s25, 0
      %p52 = por %p50, %p51
      %s53 = ssub.s32 %s19, %s26
      %p54 = scmp.eq.s32.totalorder %s53, 0
      %s56 = sadd.s32 %s55, 1
      %s57 = scalar_select %p54, %s55, %s56
      %p60 = pneg %p54
      %p61 = scmp.eq.s32.totalorder %s19, 1
      %p62 = por %p60, %p61
      %p63 = scmp.ne.s32.totalorder %s55, %s58
      %p64 = scmp.eq.s32.totalorder %s19, 0
      %p65 = por %p63, %p64
      %p66 = scmp.ne.s32.totalorder %s55, %s58
      %p67 = scmp.eq.s32.totalorder %s24, 1
      %p68 = por %p66, %p67
      %p69 = scmp.ne.s32.totalorder %s58, %s59
      %p70 = scmp.eq.s32.totalorder %s24, 0
      %p71 = por %p69, %p70
      %p72 = scmp.ne.s32.totalorder %s58, %s59
      %p73 = scmp.eq.s32.totalorder %s25, 1
      %p74 = por %p72, %p73
      %p76 = scmp.ne.s32.totalorder %s59, %s75
      %p77 = scmp.eq.s32.totalorder %s25, 0
      %p78 = por %p76, %p77
      %s80 = sadd.s32 %s79, 1
      %p83 = scmp.eq.s32.totalorder %s19, 1
      %p84 = scmp.ne.s32.totalorder %s79, %s81
      %p85 = scmp.eq.s32.totalorder %s19, 0
      %p86 = por %p84, %p85
      %p87 = scmp.ne.s32.totalorder %s79, %s81
      %p88 = scmp.eq.s32.totalorder %s24, 1
      %p89 = por %p87, %p88
      %p90 = scmp.ne.s32.totalorder %s81, %s82
      %p91 = scmp.eq.s32.totalorder %s24, 0
      %p92 = por %p90, %p91
      %p93 = scmp.ne.s32.totalorder %s81, %s82
      %p94 = scmp.eq.s32.totalorder %s25, 1
      %p95 = por %p93, %p94
      %p97 = scmp.ne.s32.totalorder %s82, %s96
      %p98 = scmp.eq.s32.totalorder %s25, 0
      %p99 = por %p97, %p98
      %s101 = sadd.s32 %s100, 1
      %p104 = scmp.eq.s32.totalorder %s19, 1
      %p105 = scmp.ne.s32.totalorder %s100, %s102
      %p106 = scmp.eq.s32.totalorder %s19, 0
      %p107 = por %p105, %p106
      %p108 = scmp.ne.s32.totalorder %s100, %s102
      %p109 = scmp.eq.s32.totalorder %s24, 1
      %p110 = por %p108, %p109
      %p111 = scmp.ne.s32.totalorder %s102, %s103
      %p112 = scmp.eq.s32.totalorder %s24, 0
      %p113 = por %p111, %p112
      %p114 = scmp.ne.s32.totalorder %s102, %s103
      %p115 = scmp.eq.s32.totalorder %s25, 1
      %p116 = por %p114, %p115
      %p118 = scmp.ne.s32.totalorder %s103, %s117
      %p119 = scmp.eq.s32.totalorder %s25, 0
      %p120 = por %p118, %p119
      %s122 = sadd.s32 %s121, 1
      %p125 = scmp.eq.s32.totalorder %s19, 1
      %p126 = scmp.ne.s32.totalorder %s121, %s123
      %p127 = scmp.eq.s32.totalorder %s19, 0
      %p128 = por %p126, %p127
      %p129 = scmp.ne.s32.totalorder %s121, %s123
      %p130 = scmp.eq.s32.totalorder %s24, 1
      %p131 = por %p129, %p130
      %p132 = scmp.ne.s32.totalorder %s123, %s124
      %p133 = scmp.eq.s32.totalorder %s24, 0
      %p134 = por %p132, %p133
      %p135 = scmp.ne.s32.totalorder %s123, %s124
      %p136 = scmp.eq.s32.totalorder %s25, 1
      %p137 = por %p135, %p136
      %p139 = scmp.ne.s32.totalorder %s124, %s138
      %p140 = scmp.eq.s32.totalorder %s25, 0
      %p141 = por %p139, %p140
      %s143 = sadd.s32 %s142, 1
      %p146 = scmp.eq.s32.totalorder %s19, 1
      %p147 = scmp.ne.s32.totalorder %s142, %s144
      %p148 = scmp.eq.s32.totalorder %s19, 0
      %p149 = por %p147, %p148
      %p150 = scmp.ne.s32.totalorder %s142, %s144
      %p151 = scmp.eq.s32.totalorder %s24, 1
      %p152 = por %p150, %p151
      %p153 = scmp.ne.s32.totalorder %s144, %s145
      %p154 = scmp.eq.s32.totalorder %s24, 0
      %p155 = por %p153, %p154
      %p156 = scmp.ne.s32.totalorder %s144, %s145
      %p157 = scmp.eq.s32.totalorder %s25, 1
      %p158 = por %p156, %p157
      %p160 = scmp.ne.s32.totalorder %s145, %s159
      %p161 = scmp.eq.s32.totalorder %s25, 0
      %p162 = por %p160, %p161
      %s163 = ssub.s32 %s19, %s26
      %p164 = scmp.eq.s32.totalorder %s163, 0
      %s166 = sadd.s32 %s165, 1
      %s167 = scalar_select %p164, %s165, %s166
      %p170 = pneg %p164
      %p171 = scmp.eq.s32.totalorder %s19, 1
      %p172 = por %p170, %p171
      %p173 = scmp.ne.s32.totalorder %s165, %s168
      %p174 = scmp.eq.s32.totalorder %s19, 0
      %p175 = por %p173, %p174
      %p176 = scmp.ne.s32.totalorder %s165, %s168
      %p177 = scmp.eq.s32.totalorder %s24, 1
      %p178 = por %p176, %p177
      %p179 = scmp.ne.s32.totalorder %s168, %s169
      %p180 = scmp.eq.s32.totalorder %s24, 0
      %p181 = por %p179, %p180
      %p182 = scmp.ne.s32.totalorder %s168, %s169
      %p183 = scmp.eq.s32.totalorder %s25, 1
      %p184 = por %p182, %p183
      %p186 = scmp.ne.s32.totalorder %s169, %s185
      %p187 = scmp.eq.s32.totalorder %s25, 0
      %p188 = por %p186, %p187
      %p189 = scmp.le.s32.totalorder 1, %s19
      %p190 = scmp.lt.s32.totalorder %s19, 3
      %p191 = pnand %p189, %p190
      %p192 = pneg %p191
      // Predicated region
      $region9: #{tpu_custom_call.1} parent=5 // pred_check
        _
      $region10: #{tpu_custom_call.1} parent=5 // pred_check_branch
        %194 = sbr.rel (%p191) target = $region12
      $region11: #{tpu_custom_call.1} parent=5 // pred_region
        %s195 = ssub.s32 %s19, 1
        // Predicated region
        $region13: #{tpu_custom_call.1} parent=11 // pred_check
          %p196 = pneg %p92
        $region14: #{tpu_custom_call.1} parent=11 // pred_check_branch
          %198 = sbr.rel (%p196) target = $region16
        $region15: #{tpu_custom_call.1} parent=11 // pred_region
          %s200 = ssub.s32 1536, 1536
          %201 = vsyncadd [#allocation6], %s200
          %s202 = sshll.u32 [#allocation5], 4
          %s203 = int_to_ptr.vmem [resolvable:$true] %s202
          %208 = dma.hbm_to_vmem [thread:$0]  %s2, 1536, %s203, [#allocation6], 128, 128, 8
        $region16: #{tpu_custom_call.1} parent=11 // pred_fallthru
          _
        // Predicated region
        $region17: #{tpu_custom_call.1} parent=11 // pred_check
          %p209 = pneg %p113
        $region18: #{tpu_custom_call.1} parent=11 // pred_check_branch
          %211 = sbr.rel (%p209) target = $region20
        $region19: #{tpu_custom_call.1} parent=11 // pred_region
          %s213 = ssub.s32 1536, 1536
          %214 = vsyncadd [#allocation6], %s213
          %s215 = sshll.u32 [#allocation7], 4
          %s216 = int_to_ptr.vmem [resolvable:$true] %s215
          %221 = dma.hbm_to_vmem [thread:$0]  %s3, 1536, %s216, [#allocation6], 128, 128, 8
        $region20: #{tpu_custom_call.1} parent=11 // pred_fallthru
          _
        // Predicated region
        $region21: #{tpu_custom_call.1} parent=11 // pred_check
          %p222 = pneg %p134
        $region22: #{tpu_custom_call.1} parent=11 // pred_check_branch
          %224 = sbr.rel (%p222) target = $region24
        $region23: #{tpu_custom_call.1} parent=11 // pred_region
          _
        $region24: #{tpu_custom_call.1} parent=11 // pred_fallthru
          _
        // Predicated region
        $region25: #{tpu_custom_call.1} parent=11 // pred_check
          %p225 = pneg %p155
        $region26: #{tpu_custom_call.1} parent=11 // pred_check_branch
          %227 = sbr.rel (%p225) target = $region28
        $region27: #{tpu_custom_call.1} parent=11 // pred_region
          _
        $region28: #{tpu_custom_call.1} parent=11 // pred_fallthru
          _
      $region12: #{tpu_custom_call.1} parent=5 // pred_fallthru
        _
      %p228 = scmp.lt.s32.totalorder %s19, 2
      // Predicated region
      $region29: #{tpu_custom_call.1} parent=5 // pred_check
        %p229 = pneg %p228
      $region30: #{tpu_custom_call.1} parent=5 // pred_check_branch
        %231 = sbr.rel (%p229) target = $region32
      $region31: #{tpu_custom_call.1} parent=5 // pred_region
        // Predicated region
        $region33: #{tpu_custom_call.1} parent=31 // pred_check
          %p232 = pneg %p39
        $region34: #{tpu_custom_call.1} parent=31 // pred_check_branch
          %234 = sbr.rel (%p232) target = $region36
        $region35: #{tpu_custom_call.1} parent=31 // pred_region
          %s235 = sand.u32 %s29, 1
          %s236 = scalar_lea.sflag [#allocation3], %s235
          %s237 = sand.u32 %s29, 1
          %s238 = smul.addr %s237, 16
          %s239 = scalar_lea.vmem [#allocation2], %s238
          %s240 = smul.u32 2, %s19
          %s242 = ssub.s32 256, 256
          %243 = vsyncadd %s236, %s242
          %s244 = smul.addr %s240, 128
          %s245 = scalar_lea.hbm %s0, %s244
          %s246 = sshll.u32 %s239, 4
          %s247 = int_to_ptr.vmem [resolvable:$true] %s246
          %252 = dma.hbm_to_vmem [thread:$0]  %s245, 256, %s247, %s236, 128, 128, 8
        $region36: #{tpu_custom_call.1} parent=31 // pred_fallthru
          _
        // Predicated region
        $region37: #{tpu_custom_call.1} parent=31 // pred_check
          %p253 = pneg %p65
        $region38: #{tpu_custom_call.1} parent=31 // pred_check_branch
          %255 = sbr.rel (%p253) target = $region40
        $region39: #{tpu_custom_call.1} parent=31 // pred_region
          %s256 = smul.u32 2, %s19
          %p257 = scmp.lt.s32.totalorder %s256, 3
          %s258 = scalar_select %p257, %s256, 3
          %s259 = smul.addr %s258, 4
          %s260 = scalar_lea.vmem %s1, %s259
          %s261 = smul.u32 2, %s19
        $region40: #{tpu_custom_call.1} parent=31 // pred_fallthru
          _
      $region32: #{tpu_custom_call.1} parent=5 // pred_fallthru
        _
      %p262 = scmp.le.s32.totalorder 1, %s19
      %p263 = scmp.lt.s32.totalorder %s19, 3
      %p264 = pnand %p262, %p263
      %p265 = pneg %p264
      // Predicated region
      $region41: #{tpu_custom_call.1} parent=5 // pred_check
        _
      $region42: #{tpu_custom_call.1} parent=5 // pred_check_branch
        %267 = sbr.rel (%p264) target = $region44
      $region43: #{tpu_custom_call.1} parent=5 // pred_region
        %s268 = ssub.s32 %s19, 1
        %s269 = sand.u32 %s32, 1
        %s270 = scalar_lea.sflag [#allocation3], %s269
        %s271 = sand.u32 %s32, 1
        %s272 = smul.addr %s271, 16
        %s273 = scalar_lea.vmem [#allocation2], %s272
        // Predicated region
        $region45: #{tpu_custom_call.1} parent=43 // pred_check
          %p274 = pneg %p45
        $region46: #{tpu_custom_call.1} parent=43 // pred_check_branch
          %276 = sbr.rel (%p274) target = $region48
        $region47: #{tpu_custom_call.1} parent=43 // pred_region
          %277 = dma.done %s270, 256
        $region48: #{tpu_custom_call.1} parent=43 // pred_fallthru
          _
        // Predicated region
        $region49: #{tpu_custom_call.1} parent=43 // pred_check
          %p278 = pneg %p92
        $region50: #{tpu_custom_call.1} parent=43 // pred_check_branch
          %280 = sbr.rel (%p278) target = $region52
        $region51: #{tpu_custom_call.1} parent=43 // pred_region
          %281 = dma.done [#allocation6], 1536
        $region52: #{tpu_custom_call.1} parent=43 // pred_fallthru
          _
        // Predicated region
        $region53: #{tpu_custom_call.1} parent=43 // pred_check
          %p282 = pneg %p113
        $region54: #{tpu_custom_call.1} parent=43 // pred_check_branch
          %284 = sbr.rel (%p282) target = $region56
        $region55: #{tpu_custom_call.1} parent=43 // pred_region
          %285 = dma.done [#allocation6], 1536
        $region56: #{tpu_custom_call.1} parent=43 // pred_fallthru
          _
        %s286 = sand.u32 %s32, 1
        %s287 = scalar_lea.sflag [#allocation3], %s286
        %s288 = sand.u32 %s32, 1
        %s289 = smul.addr %s288, 16
        %s290 = scalar_lea.vmem [#allocation2], %s289
        %p291 = pneg %p45
        %p292 = pneg %p42
        %s293 = smul.u32 2, %s24
        %p294 = scmp.lt.s32.totalorder %s293, 3
        %s295 = scalar_select %p294, %s293, 3
        %s296 = smul.addr %s295, 4
        %s297 = scalar_lea.vmem %s1, %s296
        %p298 = pneg %p71
        %p299 = pneg %p68
        %p300 = pneg %p92
        %p301 = pneg %p89
        %p302 = pneg %p113
        %p303 = pneg %p110
        %p304 = pneg %p134
        %p305 = pneg %p131
        %p306 = pneg %p155
        %p307 = pneg %p152
        %p308 = pneg %p181
        %p309 = pneg %p178
        %s310 = sand.u32 %s168, 1
        %s311 = scalar_lea.sflag [#allocation4], %s310
        %s312 = sand.u32 %s168, 1
        %s313 = smul.addr %s312, 16
        %s314 = scalar_lea.vmem [#allocation8], %s313
        %s315 = smul.u32 2, %s24
        %s316 = smul.u32 2, %s24
        %p317 = scmp.lt.s32.totalorder %s316, 3
        %s318 = scalar_select %p317, %s316, 3
        %s319 = smul.addr %s318, 4
        %s320 = scalar_lea.vmem %s1, %s319
        %s321 = smul.u32 2, %s24
        %s322 = smul.u32 2, %s24
        %v323 = vld [vmem:[%s273] sm:$0xff]
        %v324 = vld [vmem:[%s273 + $0x8] sm:$0xff]
        %v325 = vld [vmem:[%s320] sm:$0xf]
        %v326 = vld [vmem:[%s320 + $0x4] sm:$0xf]
        %v327 = vunpack.c.l.bf16 %v325
        %v328 = vunpack.c.l.bf16 %v326
        %330 = vset.pattern.permute.xlu0 0
        %331 = vperm.xlu0 %330, %v327
        %v332 = vpop.permute.xlu0 %331
        %335 = vset.pattern.permute.xlu0 0
        %336 = vperm.xlu0 %335, %v328
        %v337 = vpop.permute.xlu0 %336
        %v339 = vmul.f32 %v323, %v332
        %v340 = vmul.f32 %v324, %v337
        %v341 = vlaneseq
        %v342 = vshrl.u32 %v341, 7
        %v343 = vadd.s32 %v342, 8
        %vm344 = vcmp.lt.s32.totalorder %v342, 0
        %v345 = vsub.s32 0, %v342
        %v346 = vsel %vm344, %v345, %v342
        %v347 = vshrl.u32 %v346, 4
        %v348 = vand.u32 %v346, 15
        %v349 = vsub.s32 0, %v348
        %v350 = vsel %vm344, %v349, %v348
        %vm351 = vcmp.lt.s32.totalorder %v343, 0
        %v352 = vsub.s32 0, %v343
        %v353 = vsel %vm351, %v352, %v343
        %v354 = vshrl.u32 %v353, 4
        %v355 = vand.u32 %v353, 15
        %v356 = vsub.s32 0, %v355
        %v357 = vsel %vm351, %v356, %v355
        %vm358 = vcmp.ne.s32.totalorder %v350, 0
        %vm359 = vcmp.ne.s32.totalorder %v357, 0
        %vm360 = vcmp.lt.s32.totalorder %v350, 0
        %vm361 = vcmp.lt.s32.totalorder %v357, 0
        %vm362 = vmand %vm360, %vm358
        %vm363 = vmand %vm361, %vm359
        %v364 = vadd.s32 %v350, 16
        %v365 = vadd.s32 %v357, 16
        %v366 = vsel %vm362, %v364, %v350
        %v367 = vsel %vm363, %v365, %v357
        %vm368 = vcmp.eq.s32.totalorder %v366, 0
        %vm369 = vcmp.eq.s32.totalorder %v367, 0
        %v370 = vrot.slane %v339, 7
        %v371 = vrot.slane %v340, 7
        %vm372 = vcmp.lt.s32.totalorder %v342, 1
        %v373 = vsel %vm372, %v370, %v371
        %v374 = vsel %vm372, %v371, %v370
        %v375 = vsel %vm368, 1, 0
        %v376 = vsel %vm369, 1, 0
        %vm377 = vcmp.eq.s32.totalorder %v375, 1
        %vm378 = vcmp.eq.s32.totalorder %v376, 1
        %v379 = vsel %vm377, 0.0, %v374
        %v380 = vsel %vm378, 0.0, %v373
        %vm381 = vcmp.eq.s32.totalorder %v366, 15
        %vm382 = vcmp.eq.s32.totalorder %v367, 15
        %v383 = vrot.slane %v339, 1
        %v384 = vrot.slane %v340, 1
        %vm385 = vcmp.lt.s32.totalorder %v342, 7
        %v386 = vsel %vm385, %v383, %v384
        %v387 = vsel %vm385, %v384, %v383
        %v388 = vsel %vm381, 1, 0
        %v389 = vsel %vm382, 1, 0
        %vm390 = vcmp.eq.s32.totalorder %v388, 1
        %vm391 = vcmp.eq.s32.totalorder %v389, 1
        %v392 = vsel %vm390, 0.0, %v386
        %v393 = vsel %vm391, 0.0, %v387
        %v394 = vld [vmem:[#allocation5] sm:$0xff]
        %v395 = vld [vmem:[#allocation5 + $0x8] sm:$0xff]
        %v396 = vld [vmem:[#allocation5 + $0x10] sm:$0xff]
        %v397 = vld [vmem:[#allocation5 + $0x18] sm:$0xff]
        %s398 = scalar_lea.vmem [#allocation5], 32
        %v399 = vld [vmem:[%s398] sm:$0xff]
        %v400 = vld [vmem:[%s398 + $0x8] sm:$0xff]
        %v401 = vld [vmem:[%s398 + $0x10] sm:$0xff]
        %v402 = vld [vmem:[%s398 + $0x18] sm:$0xff]
        %vm403 = vcmask 261120
        %v405 = vsel %vm403, %v339, 0
        %v408 = vsel %vm403, %v340, 0
        %410 = vmatprep.subr.mxu0 0.0
        %411 = vmatpush1.msra.mxu0 %v399
        %412 = vmatprep.subr.mxu0 0.0
        %413 = vmatpush1.msra.mxu0 %v400
        %414 = vmatprep.subr.mxu0 0.0
        %415 = vmatpush1.msra.mxu0 %v401
        %416 = vmatprep.subr.mxu0 0.0
        %417 = vmatpush1.msra.mxu0 %v402
        %418 = vmatprep.subr.mxu0 0.0
        %419 = vmatpush1.msra.mxu0 0.0
        %420 = vmatprep.subr.mxu0 0.0
        %421 = vmatpush1.msra.mxu0 0.0
        %422 = vmatprep.subr.mxu0 0.0
        %423 = vmatpush1.msra.mxu0 0.0
        %424 = vmatprep.subr.mxu0 0.0
        %425 = vmatpush1.msra.mxu0 0.0
        %426 = vmatprep.subr.mxu0 0.0
        %427 = vmatpush1.msra.mxu0 0.0
        %428 = vmatprep.subr.mxu0 0.0
        %429 = vmatpush1.msra.mxu0 0.0
        %430 = vmatprep.subr.mxu0 0.0
        %431 = vmatpush1.msra.mxu0 0.0
        %432 = vmatprep.subr.mxu0 0.0
        %433 = vmatpush1.msra.mxu0 0.0
        %434 = vmatprep.subr.mxu0 0.0
        %435 = vmatpush1.msra.mxu0 0.0
        %436 = vmatprep.subr.mxu0 0.0
        %437 = vmatpush1.msra.mxu0 0.0
        %438 = vmatprep.subr.mxu0 0.0
        %439 = vmatpush1.msra.mxu0 0.0
        %440 = vmatprep.subr.mxu0 0.0
        %441 = vmatpush1.msra.mxu0 0.0
        %442 = vmatprep.subr.mxu0 0.0
        %443 = vmatpush1.msra.mxu0 0.0
        %444 = vmatprep.subr.mxu0 0.0
        %445 = vmatpush1.msra.mxu0 0.0
        %446 = vmatprep.subr.mxu0 0.0
        %447 = vmatpush1.msra.mxu0 0.0
        %448 = vmatprep.subr.mxu0 0.0
        %449 = vmatpush1.msra.mxu0 0.0
        %450 = vmatprep.subr.mxu0 0.0
        %451 = vmatpush1.msra.mxu0 0.0
        %452 = vmatprep.subr.mxu0 0.0
        %453 = vmatpush1.msra.mxu0 0.0
        %454 = vmatprep.subr.mxu0 0.0
        %455 = vmatpush1.msra.mxu0 0.0
        %456 = vmatprep.subr.mxu0 0.0
        %457 = vmatpush1.msra.mxu0 0.0
        %458 = vmatprep.subr.mxu0 0.0
        %459 = vmatpush1.msra.mxu0 0.0
        %460 = vmatprep.subr.mxu0 0.0
        %461 = vmatpush1.msra.mxu0 0.0
        %462 = vmatprep.subr.mxu0 0.0
        %463 = vmatpush1.msra.mxu0 0.0
        %464 = vmatprep.subr.mxu0 0.0
        %465 = vmatpush1.msra.mxu0 0.0
        %466 = vmatprep.subr.mxu0 0.0
        %467 = vmatpush1.msra.mxu0 0.0
        %468 = vmatprep.subr.mxu0 0.0
        %469 = vmatpush1.msra.mxu0 0.0
        %470 = vmatprep.subr.mxu0 0.0
        %471 = vmatpush1.msra.mxu0 0.0
        %472 = vmatprep.subr.mxu0 0.0
        %473 = vmatpush1.msra.mxu0 0.0
        %474 = vmatprep.mubr.f32.mxu0 0.0
        %475 = vmatmul.mubr.f32.gmra.mrb[0].mxu0 %v405
        %v476 = vpop.f32.mrb[0].mxu0
        %v477 = vadd.f32 0.0, %v476
        %v478 = vpop.f32.mrb[0].mxu0
        %479 = vmatprep.mubr.f32.mxu0 0.0
        %480 = vmatmul.mubr.f32.gmra.mrb[0].mxu0 %v408
        %v481 = vpop.f32.mrb[0].mxu0
        %v482 = vadd.f32 0.0, %v481
        %v483 = vpop.f32.mrb[0].mxu0
        %484 = vdwg.mxu0
        %v486 = vsel %vm403, %v379, 0
        %v489 = vsel %vm403, %v380, 0
        %491 = vmatprep.subr.mxu0 0.0
        %492 = vmatpush1.msra.mxu0 %v394
        %493 = vmatprep.subr.mxu0 0.0
        %494 = vmatpush1.msra.mxu0 %v395
        %495 = vmatprep.subr.mxu0 0.0
        %496 = vmatpush1.msra.mxu0 %v396
        %497 = vmatprep.subr.mxu0 0.0
        %498 = vmatpush1.msra.mxu0 %v397
        %499 = vmatprep.subr.mxu0 0.0
        %500 = vmatpush1.msra.mxu0 0.0
        %501 = vmatprep.subr.mxu0 0.0
        %502 = vmatpush1.msra.mxu0 0.0
        %503 = vmatprep.subr.mxu0 0.0
        %504 = vmatpush1.msra.mxu0 0.0
        %505 = vmatprep.subr.mxu0 0.0
        %506 = vmatpush1.msra.mxu0 0.0
        %507 = vmatprep.subr.mxu0 0.0
        %508 = vmatpush1.msra.mxu0 0.0
        %509 = vmatprep.subr.mxu0 0.0
        %510 = vmatpush1.msra.mxu0 0.0
        %511 = vmatprep.subr.mxu0 0.0
        %512 = vmatpush1.msra.mxu0 0.0
        %513 = vmatprep.subr.mxu0 0.0
        %514 = vmatpush1.msra.mxu0 0.0
        %515 = vmatprep.subr.mxu0 0.0
        %516 = vmatpush1.msra.mxu0 0.0
        %517 = vmatprep.subr.mxu0 0.0
        %518 = vmatpush1.msra.mxu0 0.0
        %519 = vmatprep.subr.mxu0 0.0
        %520 = vmatpush1.msra.mxu0 0.0
        %521 = vmatprep.subr.mxu0 0.0
        %522 = vmatpush1.msra.mxu0 0.0
        %523 = vmatprep.subr.mxu0 0.0
        %524 = vmatpush1.msra.mxu0 0.0
        %525 = vmatprep.subr.mxu0 0.0
        %526 = vmatpush1.msra.mxu0 0.0
        %527 = vmatprep.subr.mxu0 0.0
        %528 = vmatpush1.msra.mxu0 0.0
        %529 = vmatprep.subr.mxu0 0.0
        %530 = vmatpush1.msra.mxu0 0.0
        %531 = vmatprep.subr.mxu0 0.0
        %532 = vmatpush1.msra.mxu0 0.0
        %533 = vmatprep.subr.mxu0 0.0
        %534 = vmatpush1.msra.mxu0 0.0
        %535 = vmatprep.subr.mxu0 0.0
        %536 = vmatpush1.msra.mxu0 0.0
        %537 = vmatprep.subr.mxu0 0.0
        %538 = vmatpush1.msra.mxu0 0.0
        %539 = vmatprep.subr.mxu0 0.0
        %540 = vmatpush1.msra.mxu0 0.0
        %541 = vmatprep.subr.mxu0 0.0
        %542 = vmatpush1.msra.mxu0 0.0
        %543 = vmatprep.subr.mxu0 0.0
        %544 = vmatpush1.msra.mxu0 0.0
        %545 = vmatprep.subr.mxu0 0.0
        %546 = vmatpush1.msra.mxu0 0.0
        %547 = vmatprep.subr.mxu0 0.0
        %548 = vmatpush1.msra.mxu0 0.0
        %549 = vmatprep.subr.mxu0 0.0
        %550 = vmatpush1.msra.mxu0 0.0
        %551 = vmatprep.subr.mxu0 0.0
        %552 = vmatpush1.msra.mxu0 0.0
        %553 = vmatprep.subr.mxu0 0.0
        %554 = vmatpush1.msra.mxu0 0.0
        %555 = vmatprep.mubr.f32.mxu0 0.0
        %556 = vmatmul.mubr.f32.gmra.mrb[0].mxu0 %v486
        %v557 = vpop.f32.mrb[0].mxu0
        %v558 = vadd.f32 %v477, %v557
        %v559 = vpop.f32.mrb[0].mxu0
        %560 = vmatprep.mubr.f32.mxu0 0.0
        %561 = vmatmul.mubr.f32.gmra.mrb[0].mxu0 %v489
        %v562 = vpop.f32.mrb[0].mxu0
        %v563 = vadd.f32 %v482, %v562
        %v564 = vpop.f32.mrb[0].mxu0
        %565 = vdwg.mxu0
        %s566 = scalar_lea.vmem [#allocation5], 64
        %v567 = vld [vmem:[%s566] sm:$0xff]
        %v568 = vld [vmem:[%s566 + $0x8] sm:$0xff]
        %v569 = vld [vmem:[%s566 + $0x10] sm:$0xff]
        %v570 = vld [vmem:[%s566 + $0x18] sm:$0xff]
        %v572 = vsel %vm403, %v392, 0
        %v575 = vsel %vm403, %v393, 0
        %577 = vmatprep.subr.mxu0 0.0
        %578 = vmatpush1.msra.mxu0 %v567
        %579 = vmatprep.subr.mxu0 0.0
        %580 = vmatpush1.msra.mxu0 %v568
        %581 = vmatprep.subr.mxu0 0.0
        %582 = vmatpush1.msra.mxu0 %v569
        %583 = vmatprep.subr.mxu0 0.0
        %584 = vmatpush1.msra.mxu0 %v570
        %585 = vmatprep.subr.mxu0 0.0
        %586 = vmatpush1.msra.mxu0 0.0
        %587 = vmatprep.subr.mxu0 0.0
        %588 = vmatpush1.msra.mxu0 0.0
        %589 = vmatprep.subr.mxu0 0.0
        %590 = vmatpush1.msra.mxu0 0.0
        %591 = vmatprep.subr.mxu0 0.0
        %592 = vmatpush1.msra.mxu0 0.0
        %593 = vmatprep.subr.mxu0 0.0
        %594 = vmatpush1.msra.mxu0 0.0
        %595 = vmatprep.subr.mxu0 0.0
        %596 = vmatpush1.msra.mxu0 0.0
        %597 = vmatprep.subr.mxu0 0.0
        %598 = vmatpush1.msra.mxu0 0.0
        %599 = vmatprep.subr.mxu0 0.0
        %600 = vmatpush1.msra.mxu0 0.0
        %601 = vmatprep.subr.mxu0 0.0
        %602 = vmatpush1.msra.mxu0 0.0
        %603 = vmatprep.subr.mxu0 0.0
        %604 = vmatpush1.msra.mxu0 0.0
        %605 = vmatprep.subr.mxu0 0.0
        %606 = vmatpush1.msra.mxu0 0.0
        %607 = vmatprep.subr.mxu0 0.0
        %608 = vmatpush1.msra.mxu0 0.0
        %609 = vmatprep.subr.mxu0 0.0
        %610 = vmatpush1.msra.mxu0 0.0
        %611 = vmatprep.subr.mxu0 0.0
        %612 = vmatpush1.msra.mxu0 0.0
        %613 = vmatprep.subr.mxu0 0.0
        %614 = vmatpush1.msra.mxu0 0.0
        %615 = vmatprep.subr.mxu0 0.0
        %616 = vmatpush1.msra.mxu0 0.0
        %617 = vmatprep.subr.mxu0 0.0
        %618 = vmatpush1.msra.mxu0 0.0
        %619 = vmatprep.subr.mxu0 0.0
        %620 = vmatpush1.msra.mxu0 0.0
        %621 = vmatprep.subr.mxu0 0.0
        %622 = vmatpush1.msra.mxu0 0.0
        %623 = vmatprep.subr.mxu0 0.0
        %624 = vmatpush1.msra.mxu0 0.0
        %625 = vmatprep.subr.mxu0 0.0
        %626 = vmatpush1.msra.mxu0 0.0
        %627 = vmatprep.subr.mxu0 0.0
        %628 = vmatpush1.msra.mxu0 0.0
        %629 = vmatprep.subr.mxu0 0.0
        %630 = vmatpush1.msra.mxu0 0.0
        %631 = vmatprep.subr.mxu0 0.0
        %632 = vmatpush1.msra.mxu0 0.0
        %633 = vmatprep.subr.mxu0 0.0
        %634 = vmatpush1.msra.mxu0 0.0
        %635 = vmatprep.subr.mxu0 0.0
        %636 = vmatpush1.msra.mxu0 0.0
        %637 = vmatprep.subr.mxu0 0.0
        %638 = vmatpush1.msra.mxu0 0.0
        %639 = vmatprep.subr.mxu0 0.0
        %640 = vmatpush1.msra.mxu0 0.0
        %641 = vmatprep.mubr.f32.mxu0 0.0
        %642 = vmatmul.mubr.f32.gmra.mrb[0].mxu0 %v572
        %v643 = vpop.f32.mrb[0].mxu0
        %v644 = vadd.f32 0.0, %v643
        %v645 = vpop.f32.mrb[0].mxu0
        %646 = vmatprep.mubr.f32.mxu0 0.0
        %647 = vmatmul.mubr.f32.gmra.mrb[0].mxu0 %v575
        %v648 = vpop.f32.mrb[0].mxu0
        %v649 = vadd.f32 0.0, %v648
        %v650 = vpop.f32.mrb[0].mxu0
        %651 = vdwg.mxu0
        %v652 = vadd.f32 %v558, %v644
        %v653 = vadd.f32 %v563, %v649
        %v654 = vld [vmem:[%s4] sm:$0x1]
        %v656 = vlaneseq
        %v657 = vshrl.u32 %v656, 7
        %v658 = vsub.s32 0, %v657
        %v659 = vrot.slane %v654, %v658
        %v661 = vadd.f32 %v652, %v659
        %v662 = vadd.f32 %v653, %v659
        %v663 = vld [vmem:[#allocation7] sm:$0xff]
        %v664 = vld [vmem:[#allocation7 + $0x8] sm:$0xff]
        %v665 = vld [vmem:[#allocation7 + $0x10] sm:$0xff]
        %v666 = vld [vmem:[#allocation7 + $0x18] sm:$0xff]
        %s667 = scalar_lea.vmem [#allocation7], 32
        %v668 = vld [vmem:[%s667] sm:$0xff]
        %v669 = vld [vmem:[%s667 + $0x8] sm:$0xff]
        %v670 = vld [vmem:[%s667 + $0x10] sm:$0xff]
        %v671 = vld [vmem:[%s667 + $0x18] sm:$0xff]
        %672 = vmatprep.subr.mxu0 0.0
        %673 = vmatpush1.msra.mxu0 %v668
        %674 = vmatprep.subr.mxu0 0.0
        %675 = vmatpush1.msra.mxu0 %v669
        %676 = vmatprep.subr.mxu0 0.0
        %677 = vmatpush1.msra.mxu0 %v670
        %678 = vmatprep.subr.mxu0 0.0
        %679 = vmatpush1.msra.mxu0 %v671
        %680 = vmatprep.subr.mxu0 0.0
        %681 = vmatpush1.msra.mxu0 0.0
        %682 = vmatprep.subr.mxu0 0.0
        %683 = vmatpush1.msra.mxu0 0.0
        %684 = vmatprep.subr.mxu0 0.0
        %685 = vmatpush1.msra.mxu0 0.0
        %686 = vmatprep.subr.mxu0 0.0
        %687 = vmatpush1.msra.mxu0 0.0
        %688 = vmatprep.subr.mxu0 0.0
        %689 = vmatpush1.msra.mxu0 0.0
        %690 = vmatprep.subr.mxu0 0.0
        %691 = vmatpush1.msra.mxu0 0.0
        %692 = vmatprep.subr.mxu0 0.0
        %693 = vmatpush1.msra.mxu0 0.0
        %694 = vmatprep.subr.mxu0 0.0
        %695 = vmatpush1.msra.mxu0 0.0
        %696 = vmatprep.subr.mxu0 0.0
        %697 = vmatpush1.msra.mxu0 0.0
        %698 = vmatprep.subr.mxu0 0.0
        %699 = vmatpush1.msra.mxu0 0.0
        %700 = vmatprep.subr.mxu0 0.0
        %701 = vmatpush1.msra.mxu0 0.0
        %702 = vmatprep.subr.mxu0 0.0
        %703 = vmatpush1.msra.mxu0 0.0
        %704 = vmatprep.subr.mxu0 0.0
        %705 = vmatpush1.msra.mxu0 0.0
        %706 = vmatprep.subr.mxu0 0.0
        %707 = vmatpush1.msra.mxu0 0.0
        %708 = vmatprep.subr.mxu0 0.0
        %709 = vmatpush1.msra.mxu0 0.0
        %710 = vmatprep.subr.mxu0 0.0
        %711 = vmatpush1.msra.mxu0 0.0
        %712 = vmatprep.subr.mxu0 0.0
        %713 = vmatpush1.msra.mxu0 0.0
        %714 = vmatprep.subr.mxu0 0.0
        %715 = vmatpush1.msra.mxu0 0.0
        %716 = vmatprep.subr.mxu0 0.0
        %717 = vmatpush1.msra.mxu0 0.0
        %718 = vmatprep.subr.mxu0 0.0
        %719 = vmatpush1.msra.mxu0 0.0
        %720 = vmatprep.subr.mxu0 0.0
        %721 = vmatpush1.msra.mxu0 0.0
        %722 = vmatprep.subr.mxu0 0.0
        %723 = vmatpush1.msra.mxu0 0.0
        %724 = vmatprep.subr.mxu0 0.0
        %725 = vmatpush1.msra.mxu0 0.0
        %726 = vmatprep.subr.mxu0 0.0
        %727 = vmatpush1.msra.mxu0 0.0
        %728 = vmatprep.subr.mxu0 0.0
        %729 = vmatpush1.msra.mxu0 0.0
        %730 = vmatprep.subr.mxu0 0.0
        %731 = vmatpush1.msra.mxu0 0.0
        %732 = vmatprep.subr.mxu0 0.0
        %733 = vmatpush1.msra.mxu0 0.0
        %734 = vmatprep.subr.mxu0 0.0
        %735 = vmatpush1.msra.mxu0 0.0
        %736 = vmatprep.mubr.f32.mxu0 0.0
        %737 = vmatmul.mubr.f32.gmra.mrb[0].mxu0 %v405
        %v738 = vpop.f32.mrb[0].mxu0
        %v739 = vadd.f32 0.0, %v738
        %v740 = vpop.f32.mrb[0].mxu0
        %741 = vmatprep.mubr.f32.mxu0 0.0
        %742 = vmatmul.mubr.f32.gmra.mrb[0].mxu0 %v408
        %v743 = vpop.f32.mrb[0].mxu0
        %v744 = vadd.f32 0.0, %v743
        %v745 = vpop.f32.mrb[0].mxu0
        %746 = vdwg.mxu0
        %747 = vmatprep.subr.mxu0 0.0
        %748 = vmatpush1.msra.mxu0 %v663
        %749 = vmatprep.subr.mxu0 0.0
        %750 = vmatpush1.msra.mxu0 %v664
        %751 = vmatprep.subr.mxu0 0.0
        %752 = vmatpush1.msra.mxu0 %v665
        %753 = vmatprep.subr.mxu0 0.0
        %754 = vmatpush1.msra.mxu0 %v666
        %755 = vmatprep.subr.mxu0 0.0
        %756 = vmatpush1.msra.mxu0 0.0
        %757 = vmatprep.subr.mxu0 0.0
        %758 = vmatpush1.msra.mxu0 0.0
        %759 = vmatprep.subr.mxu0 0.0
        %760 = vmatpush1.msra.mxu0 0.0
        %761 = vmatprep.subr.mxu0 0.0
        %762 = vmatpush1.msra.mxu0 0.0
        %763 = vmatprep.subr.mxu0 0.0
        %764 = vmatpush1.msra.mxu0 0.0
        %765 = vmatprep.subr.mxu0 0.0
        %766 = vmatpush1.msra.mxu0 0.0
        %767 = vmatprep.subr.mxu0 0.0
        %768 = vmatpush1.msra.mxu0 0.0
        %769 = vmatprep.subr.mxu0 0.0
        %770 = vmatpush1.msra.mxu0 0.0
        %771 = vmatprep.subr.mxu0 0.0
        %772 = vmatpush1.msra.mxu0 0.0
        %773 = vmatprep.subr.mxu0 0.0
        %774 = vmatpush1.msra.mxu0 0.0
        %775 = vmatprep.subr.mxu0 0.0
        %776 = vmatpush1.msra.mxu0 0.0
        %777 = vmatprep.subr.mxu0 0.0
        %778 = vmatpush1.msra.mxu0 0.0
        %779 = vmatprep.subr.mxu0 0.0
        %780 = vmatpush1.msra.mxu0 0.0
        %781 = vmatprep.subr.mxu0 0.0
        %782 = vmatpush1.msra.mxu0 0.0
        %783 = vmatprep.subr.mxu0 0.0
        %784 = vmatpush1.msra.mxu0 0.0
        %785 = vmatprep.subr.mxu0 0.0
        %786 = vmatpush1.msra.mxu0 0.0
        %787 = vmatprep.subr.mxu0 0.0
        %788 = vmatpush1.msra.mxu0 0.0
        %789 = vmatprep.subr.mxu0 0.0
        %790 = vmatpush1.msra.mxu0 0.0
        %791 = vmatprep.subr.mxu0 0.0
        %792 = vmatpush1.msra.mxu0 0.0
        %793 = vmatprep.subr.mxu0 0.0
        %794 = vmatpush1.msra.mxu0 0.0
        %795 = vmatprep.subr.mxu0 0.0
        %796 = vmatpush1.msra.mxu0 0.0
        %797 = vmatprep.subr.mxu0 0.0
        %798 = vmatpush1.msra.mxu0 0.0
        %799 = vmatprep.subr.mxu0 0.0
        %800 = vmatpush1.msra.mxu0 0.0
        %801 = vmatprep.subr.mxu0 0.0
        %802 = vmatpush1.msra.mxu0 0.0
        %803 = vmatprep.subr.mxu0 0.0
        %804 = vmatpush1.msra.mxu0 0.0
        %805 = vmatprep.subr.mxu0 0.0
        %806 = vmatpush1.msra.mxu0 0.0
        %807 = vmatprep.subr.mxu0 0.0
        %808 = vmatpush1.msra.mxu0 0.0
        %809 = vmatprep.subr.mxu0 0.0
        %810 = vmatpush1.msra.mxu0 0.0
        %811 = vmatprep.mubr.f32.mxu0 0.0
        %812 = vmatmul.mubr.f32.gmra.mrb[0].mxu0 %v486
        %v813 = vpop.f32.mrb[0].mxu0
        %v814 = vadd.f32 %v739, %v813
        %v815 = vpop.f32.mrb[0].mxu0
        %816 = vmatprep.mubr.f32.mxu0 0.0
        %817 = vmatmul.mubr.f32.gmra.mrb[0].mxu0 %v489
        %v818 = vpop.f32.mrb[0].mxu0
        %v819 = vadd.f32 %v744, %v818
        %v820 = vpop.f32.mrb[0].mxu0
        %821 = vdwg.mxu0
        %s822 = scalar_lea.vmem [#allocation7], 64
        %v823 = vld [vmem:[%s822] sm:$0xff]
        %v824 = vld [vmem:[%s822 + $0x8] sm:$0xff]
        %v825 = vld [vmem:[%s822 + $0x10] sm:$0xff]
        %v826 = vld [vmem:[%s822 + $0x18] sm:$0xff]
        %827 = vmatprep.subr.mxu0 0.0
        %828 = vmatpush1.msra.mxu0 %v823
        %829 = vmatprep.subr.mxu0 0.0
        %830 = vmatpush1.msra.mxu0 %v824
        %831 = vmatprep.subr.mxu0 0.0
        %832 = vmatpush1.msra.mxu0 %v825
        %833 = vmatprep.subr.mxu0 0.0
        %834 = vmatpush1.msra.mxu0 %v826
        %835 = vmatprep.subr.mxu0 0.0
        %836 = vmatpush1.msra.mxu0 0.0
        %837 = vmatprep.subr.mxu0 0.0
        %838 = vmatpush1.msra.mxu0 0.0
        %839 = vmatprep.subr.mxu0 0.0
        %840 = vmatpush1.msra.mxu0 0.0
        %841 = vmatprep.subr.mxu0 0.0
        %842 = vmatpush1.msra.mxu0 0.0
        %843 = vmatprep.subr.mxu0 0.0
        %844 = vmatpush1.msra.mxu0 0.0
        %845 = vmatprep.subr.mxu0 0.0
        %846 = vmatpush1.msra.mxu0 0.0
        %847 = vmatprep.subr.mxu0 0.0
        %848 = vmatpush1.msra.mxu0 0.0
        %849 = vmatprep.subr.mxu0 0.0
        %850 = vmatpush1.msra.mxu0 0.0
        %851 = vmatprep.subr.mxu0 0.0
        %852 = vmatpush1.msra.mxu0 0.0
        %853 = vmatprep.subr.mxu0 0.0
        %854 = vmatpush1.msra.mxu0 0.0
        %855 = vmatprep.subr.mxu0 0.0
        %856 = vmatpush1.msra.mxu0 0.0
        %857 = vmatprep.subr.mxu0 0.0
        %858 = vmatpush1.msra.mxu0 0.0
        %859 = vmatprep.subr.mxu0 0.0
        %860 = vmatpush1.msra.mxu0 0.0
        %861 = vmatprep.subr.mxu0 0.0
        %862 = vmatpush1.msra.mxu0 0.0
        %863 = vmatprep.subr.mxu0 0.0
        %864 = vmatpush1.msra.mxu0 0.0
        %865 = vmatprep.subr.mxu0 0.0
        %866 = vmatpush1.msra.mxu0 0.0
        %867 = vmatprep.subr.mxu0 0.0
        %868 = vmatpush1.msra.mxu0 0.0
        %869 = vmatprep.subr.mxu0 0.0
        %870 = vmatpush1.msra.mxu0 0.0
        %871 = vmatprep.subr.mxu0 0.0
        %872 = vmatpush1.msra.mxu0 0.0
        %873 = vmatprep.subr.mxu0 0.0
        %874 = vmatpush1.msra.mxu0 0.0
        %875 = vmatprep.subr.mxu0 0.0
        %876 = vmatpush1.msra.mxu0 0.0
        %877 = vmatprep.subr.mxu0 0.0
        %878 = vmatpush1.msra.mxu0 0.0
        %879 = vmatprep.subr.mxu0 0.0
        %880 = vmatpush1.msra.mxu0 0.0
        %881 = vmatprep.subr.mxu0 0.0
        %882 = vmatpush1.msra.mxu0 0.0
        %883 = vmatprep.subr.mxu0 0.0
        %884 = vmatpush1.msra.mxu0 0.0
        %885 = vmatprep.subr.mxu0 0.0
        %886 = vmatpush1.msra.mxu0 0.0
        %887 = vmatprep.subr.mxu0 0.0
        %888 = vmatpush1.msra.mxu0 0.0
        %889 = vmatprep.subr.mxu0 0.0
        %890 = vmatpush1.msra.mxu0 0.0
        %891 = vmatprep.mubr.f32.mxu0 0.0
        %892 = vmatmul.mubr.f32.gmra.mrb[0].mxu0 %v572
        %v893 = vpop.f32.mrb[0].mxu0
        %v894 = vadd.f32 0.0, %v893
        %v895 = vpop.f32.mrb[0].mxu0
        %896 = vmatprep.mubr.f32.mxu0 0.0
        %897 = vmatmul.mubr.f32.gmra.mrb[0].mxu0 %v575
        %v898 = vpop.f32.mrb[0].mxu0
        %v899 = vadd.f32 0.0, %v898
        %v900 = vpop.f32.mrb[0].mxu0
        %901 = vdwg.mxu0
        %v902 = vadd.f32 %v814, %v894
        %v903 = vadd.f32 %v819, %v899
        %v904 = vld [vmem:[%s5] sm:$0x1]
        %v906 = vlaneseq
        %v907 = vshrl.u32 %v906, 7
        %v908 = vsub.s32 0, %v907
        %v909 = vrot.slane %v904, %v908
        %v911 = vadd.f32 %v902, %v909
        %v912 = vadd.f32 %v903, %v909
        %v913 = vxor.u32 %v911, 2147483648
        %v914 = vxor.u32 %v912, 2147483648
        %v915 = vmul.f32 %v913, 1.442695
        %v916 = vpow.pop %v915
        %v917 = vmul.f32 %v914, 1.442695
        %v918 = vpow.pop %v917
        %v919 = vadd.f32 %v916, 1.0
        %v920 = vadd.f32 %v918, 1.0
        %v921 = vrcp.pop %v919
        %v922 = vmul.f32 1.0, %v921
        %v923 = vrcp.pop %v920
        %v924 = vmul.f32 1.0, %v923
        %v925 = vsub.f32 %v661, %v339
        %v926 = vsub.f32 %v662, %v340
        %v927 = vmul.f32 %v922, %v925
        %v928 = vmul.f32 %v924, %v926
        %v929 = vadd.f32 %v339, %v927
        %v930 = vadd.f32 %v340, %v928
        %931 = vst.msk [vmem:[%s314] sm:$0xff] %vm403, %v929
        %932 = vst.msk [vmem:[%s314 + $0x8] sm:$0xff] %vm403, %v930
        %s933 = sand.u32 %s168, 1
        %s934 = scalar_lea.sflag [#allocation4], %s933
        %s935 = sand.u32 %s168, 1
        %s936 = smul.addr %s935, 16
        %s937 = scalar_lea.vmem [#allocation8], %s936
        // Predicated region
        $region57: #{tpu_custom_call.1} parent=43 // pred_check
          %p938 = pneg %p178
        $region58: #{tpu_custom_call.1} parent=43 // pred_check_branch
          %940 = sbr.rel (%p938) target = $region60
        $region59: #{tpu_custom_call.1} parent=43 // pred_region
          %s941 = smul.u32 2, %s24
          %s943 = ssub.s32 256, 256
          %944 = vsyncadd %s934, %s943
          %s945 = smul.addr %s941, 128
          %s946 = scalar_lea.hbm %s6, %s945
          %s947 = sshll.u32 %s937, 4
          %s948 = int_to_ptr.vmem [resolvable:$true] %s947
          %953 = dma.vmem_to_hbm [thread:$0]  %s948, 256, %s946, %s934, 128, 128, 8
        $region60: #{tpu_custom_call.1} parent=43 // pred_fallthru
          _
      $region44: #{tpu_custom_call.1} parent=5 // pred_fallthru
        _
      %p954 = scmp.le.s32.totalorder 2, %s19
      // Predicated region
      $region61: #{tpu_custom_call.1} parent=5 // pred_check
        %p955 = pneg %p954
      $region62: #{tpu_custom_call.1} parent=5 // pred_check_branch
        %957 = sbr.rel (%p955) target = $region64
      $region63: #{tpu_custom_call.1} parent=5 // pred_region
        %s958 = ssub.s32 %s19, 2
        // Predicated region
        $region65: #{tpu_custom_call.1} parent=63 // pred_check
          %p959 = pneg %p184
        $region66: #{tpu_custom_call.1} parent=63 // pred_check_branch
          %961 = sbr.rel (%p959) target = $region68
        $region67: #{tpu_custom_call.1} parent=63 // pred_region
          %s962 = sand.u32 %s169, 1
          %s963 = scalar_lea.sflag [#allocation4], %s962
          %s964 = sand.u32 %s169, 1
          %s965 = smul.addr %s964, 16
          %s966 = scalar_lea.vmem [#allocation8], %s965
          %967 = dma.done %s963, 256
        $region68: #{tpu_custom_call.1} parent=63 // pred_fallthru
          _
      $region64: #{tpu_custom_call.1} parent=5 // pred_fallthru
        _
    $region6: #{tpu_custom_call.1} parent=1 // loop_footer
      %s23 = sadd.s32 1, %s19
    $region7: #{tpu_custom_call.1} parent=1 // loop_footer_branch
      %18 = sbr.rel target = $region3
    $region8: #{tpu_custom_call.1} parent=1 // loop_exit
      _
    %968 = vsyncpa [#allocation3], 1
    %s969 = scalar_lea.sflag [#allocation3], 1
    %970 = vsyncpa %s969, 1
    %971 = vsyncpa [#allocation6], 1
    %972 = vsyncpa [#allocation4], 1
    %s973 = scalar_lea.sflag [#allocation4], 1
    %974 = vsyncpa %s973, 1

</llo_original>
